<compile_context>
chip_gen: v5e
topology: v5e:2x2
jax: 0.10.0
libtpu: 0.0.40
codegen_flags: <defaults>
</compile_context>

<pallas_src>
import functools
import math

import jax
import jax.numpy as jnp
from jax.experimental import pallas as pl
from jax.experimental.pallas import tpu as pltpu


def _irregular_pred_kernel(x_ref, mask_ref, w1t_ref, wp_ref, wtail_ref, beff_ref,
                           out_ref, *, activation, tb):
    # x_ref:     (TB, L, D)      batch tile (f32)
    # mask_ref:  (TB*L, 1)       0.0 at each element's row 0, 1.0 elsewhere (f32)
    # w1t_ref:   (D, d_ff)       conv1.weight[..., 0].T            (compute dtype)
    # wp_ref:    (P, L)          predict.weight                    (compute dtype)
    # wtail_ref: (d_ff, c_pad)   conv2.T @ projection.T, 0-padded  (compute dtype)
    # beff_ref:  (P, c_pad)      predict_b folded through tail + projection.bias (f32)
    # out_ref:   (TB, P, c_pad)
    L, D = x_ref.shape[1], x_ref.shape[2]
    F = w1t_ref.shape[1]
    P = wp_ref.shape[0]
    C = wtail_ref.shape[1]
    cdt = w1t_ref.dtype                              # MXU operand dtype (bf16 / f32)

    # --- first difference along seq (row 0 of each element unchanged) --------
    # Merge (TB, L) -> TB*L: cheap sublane-only reshape (D stays on the lane axis).
    x = x_ref[...].reshape(tb * L, D)                # (TB*L, D) f32
    x_prev = pltpu.roll(x, shift=1, axis=0)          # x_prev[r] = x[r-1] (wrap masked)
    x_out = x - mask_ref[...] * x_prev               # (TB*L, D) f32

    # --- conv1 (k=1, no bias) == matmul over channels; activation ------------
    h = jnp.dot(x_out.astype(cdt), w1t_ref[...],
                preferred_element_type=jnp.float32)  # (TB*L, d_ff) f32
    if activation == "relu":
        h = jnp.maximum(h, 0.0)
    else:
        h = jax.nn.gelu(h, approximate=False)        # match torch F.gelu (erf form)
    # dropout == identity (eval mode)

    # --- predict: Linear over the sequence axis (batched, no transposes) -----
    h3 = h.astype(cdt).reshape(tb, L, F)             # split leading dim (cheap)
    wp_b = jnp.broadcast_to(wp_ref[...], (tb, P, L))
    y = jax.lax.dot_general(wp_b, h3, (((2,), (1,)), ((0,), (0,))),
                            preferred_element_type=jnp.float32)   # (TB, P, d_ff) f32
    # predict.bias is folded into beff_ref via the fused tail weight.

    # --- fused conv2 + projection (single matmul, lane-dense N = c_pad) ------
    out = jnp.dot(y.astype(cdt).reshape(tb * P, F), wtail_ref[...],
                  preferred_element_type=jnp.float32)              # (TB*P, c_pad) f32
    out = out.reshape(tb, P, C) + beff_ref[...]                    # (P, c_pad) broadcast
    out_ref[...] = out.astype(out_ref.dtype)


def irregular_pred(x, conv1_w, predict_w, predict_b, conv2_w, proj_w, proj_b,
                   *, activation="relu", compute_dtype=jnp.bfloat16, batch_tile=None):
    """Fused IrregularPred forward.

    x:         (B, L, D)   float32
    conv1_w:   (d_ff, D)   nn.Conv1d(d_model, d_ff, 1, bias=False).weight[..., 0]
    predict_w: (P, L)      nn.Linear(seq_len, pred_len).weight
    predict_b: (P,)        nn.Linear(seq_len, pred_len).bias
    conv2_w:   (D, d_ff)   nn.Conv1d(d_ff, d_model, 1, bias=False).weight[..., 0]
    proj_w:    (c_out, D)  nn.Linear(d_model, c_out).weight
    proj_b:    (c_out,)    nn.Linear(d_model, c_out).bias
    Returns (B, P, c_out) float32.
    """
    B, L, D = x.shape
    d_ff = conv1_w.shape[0]
    P = predict_w.shape[0]
    c_out = proj_w.shape[0]

    # --- wrapper-side algebraic fusion (all in f32, cast afterwards) ---------
    # W_tail[f, c] = sum_d conv2_w[d, f] * proj_w[c, d]
    w_tail = jnp.dot(conv2_w.T.astype(jnp.float32), proj_w.T.astype(jnp.float32))  # (d_ff, c_out)
    # Folding predict bias bp through the tail: b_eff[p, c] = bp[p]*colsum(W_tail)[c] + proj_b[c]
    b_eff = (predict_b.astype(jnp.float32)[:, None] * jnp.sum(w_tail, axis=0)[None, :]
             + proj_b.astype(jnp.float32)[None, :])                                # (P, c_out)

    # Lane-dense output: pad the output-channel dim to a multiple of 128 so the final
    # matmul / stores are full 128-wide (same MXU cost, no masked vst).
    c_pad = -(-c_out // 128) * 128
    w_tail_p = jnp.zeros((d_ff, c_pad), jnp.float32).at[:, :c_out].set(w_tail)
    w_tail_p = w_tail_p.astype(compute_dtype)
    b_eff_p = jnp.zeros((P, c_pad), jnp.float32).at[:, :c_out].set(b_eff)

    # Pre-transpose remaining weights once so in-kernel contractions are plain matmuls.
    w1t = conv1_w.T.astype(compute_dtype)            # (D, d_ff)
    wp = predict_w.astype(compute_dtype)             # (P, L)

    # --- batch tiling: TB elements per grid step so TB*L ~ 256 ----------------
    if batch_tile is None:
        batch_tile = max(1, min(B, -(-256 // L)))
    TB = batch_tile
    nb = -(-B // TB)
    B_pad = nb * TB
    x = x.astype(jnp.float32)
    if B_pad != B:
        x = jnp.pad(x, ((0, B_pad - B), (0, 0), (0, 0)))

    # First-difference mask for the merged (TB*L, D) view: 0 at each element's row 0.
    mask_row = jnp.ones((L,), jnp.float32).at[0].set(0.0)
    mask = jnp.tile(mask_row, TB).reshape(TB * L, 1)

    kernel = functools.partial(_irregular_pred_kernel, activation=activation, tb=TB)

    out = pl.pallas_call(
        kernel,
        out_shape=jax.ShapeDtypeStruct((B_pad, P, c_pad), jnp.float32),
        grid_spec=pltpu.PrefetchScalarGridSpec(
            num_scalar_prefetch=0,
            grid=(nb,),
            in_specs=[
                pl.BlockSpec((TB, L, D), lambda b: (b, 0, 0)),
                pl.BlockSpec((TB * L, 1), lambda b: (0, 0)),
                pl.BlockSpec((D, d_ff), lambda b: (0, 0)),
                pl.BlockSpec((P, L), lambda b: (0, 0)),
                pl.BlockSpec((d_ff, c_pad), lambda b: (0, 0)),
                pl.BlockSpec((P, c_pad), lambda b: (0, 0)),
            ],
            out_specs=pl.BlockSpec((TB, P, c_pad), lambda b: (b, 0, 0)),
        ),
        compiler_params=pltpu.CompilerParams(
            dimension_semantics=("parallel",),
            vmem_limit_bytes=32 * 1024 * 1024,
        ),
    )(x, mask, w1t, wp, w_tail_p, b_eff_p)

    return out[:B, :, :c_out]


def reference(x, conv1_w, predict_w, predict_b, conv2_w, proj_w, proj_b):
    """Pure-JAX reference of the PyTorch IrregularPred forward (eval mode, relu)."""
    x_prev = jnp.concatenate([jnp.zeros_like(x[:, :1, :]), x[:, :-1, :]], axis=1)
    x_out = x - x_prev
    h = jnp.maximum(jnp.einsum("bld,fd->blf", x_out, conv1_w), 0.0)
    y = jnp.einsum("blf,pl->bpf", h, predict_w) + predict_b[None, :, None]
    z = jnp.einsum("bpf,df->bpd", y, conv2_w)
    return jnp.einsum("bpd,cd->bpc", z, proj_w) + proj_b[None, None, :]


if __name__ == "__main__":
    B, seq_len, d_model = 2, 32, 32
    d_ff, pred_len, c_out = 64, 16, 8

    key = jax.random.PRNGKey(0)
    kx, k1, kp, kpb, k2, kj, kjb = jax.random.split(key, 7)

    x = jax.random.normal(kx, (B, seq_len, d_model), dtype=jnp.float32)
    conv1_w = jax.random.normal(k1, (d_ff, d_model), jnp.float32) / math.sqrt(d_model)
    predict_w = jax.random.normal(kp, (pred_len, seq_len), jnp.float32) / math.sqrt(seq_len)
    predict_b = jax.random.normal(kpb, (pred_len,), jnp.float32) * 0.1
    conv2_w = jax.random.normal(k2, (d_model, d_ff), jnp.float32) / math.sqrt(d_ff)
    proj_w = jax.random.normal(kj, (c_out, d_model), jnp.float32) / math.sqrt(d_model)
    proj_b = jax.random.normal(kjb, (c_out,), jnp.float32) * 0.1

    out_ref = reference(x, conv1_w, predict_w, predict_b, conv2_w, proj_w, proj_b)

    # Tight check: f32 MXU operands (fused tail is computed in f32 wrapper-side).
    out_f32 = irregular_pred(x, conv1_w, predict_w, predict_b, conv2_w,
                             proj_w, proj_b, compute_dtype=jnp.float32)
    out_f32 = jax.block_until_ready(out_f32)
    assert out_f32.shape == (B, pred_len, c_out)
    assert jnp.allclose(out_f32, out_ref, atol=2e-3, rtol=2e-3), "f32 mismatch vs reference"

    # Perf-default path: bf16 MXU operands, f32 accumulation (looser tolerance).
    out_bf16 = irregular_pred(x, conv1_w, predict_w, predict_b, conv2_w,
                              proj_w, proj_b, compute_dtype=jnp.bfloat16)
    out_bf16 = jax.block_until_ready(out_bf16)
    assert out_bf16.shape == (B, pred_len, c_out)
    assert jnp.allclose(out_bf16, out_ref, atol=5e-2, rtol=5e-2), "bf16 mismatch vs reference"

    print("KERNEL_OK")
</pallas_src>

<mosaic_0001>
module attributes {stable_mosaic.version = 11 : i64} {
  func.func @_irregular_pred_kernel(%arg0: i32, %arg1: memref<2x32x32xf32, #tpu.memory_space<vmem>>, %arg2: memref<64x1xf32, #tpu.memory_space<vmem>>, %arg3: memref<32x64xf32, #tpu.memory_space<vmem>>, %arg4: memref<16x32xf32, #tpu.memory_space<vmem>>, %arg5: memref<64x128xf32, #tpu.memory_space<vmem>>, %arg6: memref<16x128xf32, #tpu.memory_space<vmem>>, %arg7: memref<2x16x128xf32, #tpu.memory_space<vmem>>) attributes {dimension_semantics = [#tpu.dimension_semantics<parallel>], iteration_bounds = array<i64: 1>, scalar_prefetch = 0 : i64, scratch_operands = 0 : i64, tpu.core_type = #tpu.core_type<tc>, window_params = [{transform_indices = @transform_0, window_bounds = array<i64: 2, 32, 32>}, {pipeline_mode = #tpu.pipeline_mode<synchronous>, transform_indices = @transform_1, window_bounds = array<i64: 64, 1>}, {pipeline_mode = #tpu.pipeline_mode<synchronous>, transform_indices = @transform_2, window_bounds = array<i64: 32, 64>}, {pipeline_mode = #tpu.pipeline_mode<synchronous>, transform_indices = @transform_3, window_bounds = array<i64: 16, 32>}, {pipeline_mode = #tpu.pipeline_mode<synchronous>, transform_indices = @transform_4, window_bounds = array<i64: 64, 128>}, {pipeline_mode = #tpu.pipeline_mode<synchronous>, transform_indices = @transform_5, window_bounds = array<i64: 16, 128>}, {transform_indices = @transform_6, window_bounds = array<i64: 2, 16, 128>}]} {
    %c0 = arith.constant 0 : index
    %c0_0 = arith.constant 0 : index
    %c0_1 = arith.constant 0 : index
    %0 = vector.load %arg1[%c0, %c0_0, %c0_1] : memref<2x32x32xf32, #tpu.memory_space<vmem>>, vector<2x32x32xf32>
    %1 = vector.shape_cast %0 : vector<2x32x32xf32> to vector<64x32xf32>
    %c1_i32 = arith.constant 1 : i32
    %2 = tpu.dynamic_rotate %1 by %c1_i32 dim 0 : vector<64x32xf32>, i32 -> vector<64x32xf32>
    %c0_2 = arith.constant 0 : index
    %c0_3 = arith.constant 0 : index
    %3 = vector.load %arg2[%c0_2, %c0_3] : memref<64x1xf32, #tpu.memory_space<vmem>>, vector<64x1xf32>
    %4 = vector.broadcast %3 : vector<64x1xf32> to vector<64x32xf32>
    %5 = arith.mulf %4, %2 : vector<64x32xf32>
    %6 = arith.subf %1, %5 : vector<64x32xf32>
    %c0_4 = arith.constant 0 : index
    %c0_5 = arith.constant 0 : index
    %7 = vector.load %arg3[%c0_4, %c0_5] : memref<32x64xf32, #tpu.memory_space<vmem>>, vector<32x64xf32>
    %cst = arith.constant dense<0.000000e+00> : vector<64x64xf32>
    %8 = tpu.matmul %6, %7, %cst {dimension_numbers = #tpu.dot_dimension_numbers<[1], [0], [0], [1], [0, 0, 1, 1], [], []>} : vector<64x32xf32>, vector<32x64xf32>, vector<64x64xf32> -> vector<64x64xf32>
    %cst_6 = arith.constant 0.000000e+00 : f32
    %9 = vector.broadcast %cst_6 : f32 to vector<64x64xf32>
    %10 = arith.maximumf %8, %9 : vector<64x64xf32>
    %11 = vector.shape_cast %10 : vector<64x64xf32> to vector<2x32x64xf32>
    %c0_7 = arith.constant 0 : index
    %c0_8 = arith.constant 0 : index
    %12 = vector.load %arg4[%c0_7, %c0_8] : memref<16x32xf32, #tpu.memory_space<vmem>>, vector<16x32xf32>
    %13 = vector.shape_cast %12 : vector<16x32xf32> to vector<1x16x32xf32>
    %14 = vector.broadcast %13 : vector<1x16x32xf32> to vector<2x16x32xf32>
    %cst_9 = arith.constant dense<0.000000e+00> : vector<2x16x64xf32>
    %15 = tpu.matmul %14, %11, %cst_9 {dimension_numbers = #tpu.dot_dimension_numbers<[2], [1], [1], [2], [0, 0, 0, 1, 1, 2], [0], [0]>} : vector<2x16x32xf32>, vector<2x32x64xf32>, vector<2x16x64xf32> -> vector<2x16x64xf32>
    %16 = vector.shape_cast %15 : vector<2x16x64xf32> to vector<32x64xf32>
    %c0_10 = arith.constant 0 : index
    %c0_11 = arith.constant 0 : index
    %17 = vector.load %arg5[%c0_10, %c0_11] : memref<64x128xf32, #tpu.memory_space<vmem>>, vector<64x128xf32>
    %cst_12 = arith.constant dense<0.000000e+00> : vector<32x128xf32>
    %18 = tpu.matmul %16, %17, %cst_12 {dimension_numbers = #tpu.dot_dimension_numbers<[1], [0], [0], [1], [0, 0, 1, 1], [], []>} : vector<32x64xf32>, vector<64x128xf32>, vector<32x128xf32> -> vector<32x128xf32>
    %19 = vector.shape_cast %18 : vector<32x128xf32> to vector<2x16x128xf32>
    %c0_13 = arith.constant 0 : index
    %c0_14 = arith.constant 0 : index
    %20 = vector.load %arg6[%c0_13, %c0_14] : memref<16x128xf32, #tpu.memory_space<vmem>>, vector<16x128xf32>
    %21 = vector.shape_cast %20 : vector<16x128xf32> to vector<1x16x128xf32>
    %22 = vector.broadcast %21 : vector<1x16x128xf32> to vector<2x16x128xf32>
    %23 = arith.addf %19, %22 : vector<2x16x128xf32>
    %c0_15 = arith.constant 0 : index
    %c0_16 = arith.constant 0 : index
    %c0_17 = arith.constant 0 : index
    %24 = vector.load %arg7[%c0_15, %c0_16, %c0_17] : memref<2x16x128xf32, #tpu.memory_space<vmem>>, vector<2x16x128xf32>
    tpu.vector_store %arg7[%c0_15, %c0_16, %c0_17], %23 {strides = array<i32>} : memref<2x16x128xf32, #tpu.memory_space<vmem>>, vector<2x16x128xf32>,
    return
  }
  func.func @transform_0(%arg0: i32) -> (i32, i32, i32) {
    %c0_i32 = arith.constant 0 : i32
    %c0_i32_0 = arith.constant 0 : i32
    %c0_i32_1 = arith.constant 0 : i32
    return %arg0, %c0_i32, %c0_i32_0 : i32, i32, i32
  }
  func.func @transform_1(%arg0: i32) -> (i32, i32) {
    %c0_i32 = arith.constant 0 : i32
    %c0_i32_0 = arith.constant 0 : i32
    %c0_i32_1 = arith.constant 0 : i32
    return %c0_i32, %c0_i32_0 : i32, i32
  }
  func.func @transform_2(%arg0: i32) -> (i32, i32) {
    %c0_i32 = arith.constant 0 : i32
    %c0_i32_0 = arith.constant 0 : i32
    %c0_i32_1 = arith.constant 0 : i32
    return %c0_i32, %c0_i32_0 : i32, i32
  }
  func.func @transform_3(%arg0: i32) -> (i32, i32) {
    %c0_i32 = arith.constant 0 : i32
    %c0_i32_0 = arith.constant 0 : i32
    %c0_i32_1 = arith.constant 0 : i32
    return %c0_i32, %c0_i32_0 : i32, i32
  }
  func.func @transform_4(%arg0: i32) -> (i32, i32) {
    %c0_i32 = arith.constant 0 : i32
    %c0_i32_0 = arith.constant 0 : i32
    %c0_i32_1 = arith.constant 0 : i32
    return %c0_i32, %c0_i32_0 : i32, i32
  }
  func.func @transform_5(%arg0: i32) -> (i32, i32) {
    %c0_i32 = arith.constant 0 : i32
    %c0_i32_0 = arith.constant 0 : i32
    %c0_i32_1 = arith.constant 0 : i32
    return %c0_i32, %c0_i32_0 : i32, i32
  }
  func.func @transform_6(%arg0: i32) -> (i32, i32, i32) {
    %c0_i32 = arith.constant 0 : i32
    %c0_i32_0 = arith.constant 0 : i32
    %c0_i32_1 = arith.constant 0 : i32
    return %arg0, %c0_i32, %c0_i32_0 : i32, i32, i32
  }
}

</mosaic_0001>

<llo_original>
// kernel: tpu_custom_call.1
$region0: #{tpu_custom_call.1}
  #allocation0 [shape = 'u32[]', space=smem, size = 0x4, offset = 0x4, fixed_abs, tag = 'smem constant byte address 0x4 - core index']
  #allocation1 [shape = 'u32[72,128]{1,0:T(1,128)}', space=vmem, size = 0x9000, scoped, tag = 'internal scratch']
  %s0 = inlined_call_operand.vmem [shape: f32[2,32,32], index: 0, kind: input, shape index: {}]
  %s1 = inlined_call_operand.vmem [shape: f32[64,1], index: 1, kind: input, shape index: {}]
  %s2 = inlined_call_operand.hbm [shape: f32[32,64], index: 2, kind: input, shape index: {}]
  %s3 = inlined_call_operand.hbm [shape: f32[16,32], index: 3, kind: input, shape index: {}]
  %s4 = inlined_call_operand.hbm [shape: f32[64,128], index: 4, kind: input, shape index: {}]
  %s5 = inlined_call_operand.hbm [shape: f32[16,128], index: 5, kind: input, shape index: {}]
  %s6 = inlined_call_operand.hbm [shape: f32[2,16,128], index: 6, kind: output, shape index: {}]
  %s7 = sld [smem:[#allocation0]]
  $region50: #{tpu_custom_call.1} parent=0
    _
  %s9 = ssub.s32 1, %s7
  %s10 = scalar_select 0, %s9, %s7
  $region1: #{tpu_custom_call.1} parent=0
    #allocation2 [shape = 'u8[16384]{0}', space=vmem, size = 0x4000, scoped, tag = 'input window, operand 2, single buffered']
    #allocation3 [shape = 's32[1]{0}', space=sflag, size = 0x4, scoped, tag = 'scoped memory for tpu_custom_call.1']
    #allocation4 [shape = 's32[1]{0}', space=sflag, size = 0x4, scoped, tag = 'scoped memory for tpu_custom_call.1']
    #allocation5 [shape = 'u8[8192]{0}', space=vmem, size = 0x2000, scoped, tag = 'input window, operand 3, single buffered']
    #allocation6 [shape = 's32[1]{0}', space=sflag, size = 0x4, scoped, tag = 'scoped memory for tpu_custom_call.1']
    #allocation7 [shape = 'u8[32768]{0}', space=vmem, size = 0x8000, scoped, tag = 'input window, operand 4, single buffered']
    #allocation8 [shape = 'u8[8192]{0}', space=vmem, size = 0x2000, scoped, tag = 'input window, operand 5, single buffered']
    #allocation9 [shape = 's32[1]{0}', space=sflag, size = 0x4, scoped, tag = 'scoped memory for tpu_custom_call.1']
    #allocation10 [shape = 'u8[16384]{0}', space=vmem, size = 0x4000, scoped, tag = 'output window, operand 0, single buffered']
    %11 = vsyncpa [#allocation3], 0
    %12 = vsyncpa [#allocation6], 0
    %13 = vsyncpa [#allocation9], 0
    %14 = vsyncpa [#allocation4], 0
    // Predicated region
    $region2: #{tpu_custom_call.1} parent=1 // pred_check
      _
    $region3: #{tpu_custom_call.1} parent=1 // pred_check_branch
      %16 = sbr.rel (0) target = $region5
    $region4: #{tpu_custom_call.1} parent=1 // pred_region
      _
    $region5: #{tpu_custom_call.1} parent=1 // pred_fallthru
      _
    // Predicated region
    $region6: #{tpu_custom_call.1} parent=1 // pred_check
      _
    $region7: #{tpu_custom_call.1} parent=1 // pred_check_branch
      %18 = sbr.rel (0) target = $region9
    $region8: #{tpu_custom_call.1} parent=1 // pred_region
      _
    $region9: #{tpu_custom_call.1} parent=1 // pred_fallthru
      _
    // Predicated region
    $region10: #{tpu_custom_call.1} parent=1 // pred_check
      _
    $region11: #{tpu_custom_call.1} parent=1 // pred_check_branch
      %20 = sbr.rel (0) target = $region13
    $region12: #{tpu_custom_call.1} parent=1 // pred_region
      %22 = vsyncadd [#allocation3], 0
      %s23 = sshll.u32 %s2, 4
      %s24 = int_to_ptr.hbm [resolvable:$true] %s23
      %s25 = sshll.u32 [#allocation2], 4
      %s26 = int_to_ptr.vmem [resolvable:$true] %s25
      %31 = dma.hbm_to_vmem [thread:$0]  %s24, 512, %s26, [#allocation3], 128, 128, 8
    $region13: #{tpu_custom_call.1} parent=1 // pred_fallthru
      _
    // Predicated region
    $region14: #{tpu_custom_call.1} parent=1 // pred_check
      _
    $region15: #{tpu_custom_call.1} parent=1 // pred_check_branch
      %33 = sbr.rel (0) target = $region17
    $region16: #{tpu_custom_call.1} parent=1 // pred_region
      %35 = vsyncadd [#allocation6], 0
      %s36 = sshll.u32 %s3, 4
      %s37 = int_to_ptr.hbm [resolvable:$true] %s36
      %s38 = sshll.u32 [#allocation5], 4
      %s39 = int_to_ptr.vmem [resolvable:$true] %s38
      %44 = dma.hbm_to_vmem [thread:$0]  %s37, 256, %s39, [#allocation6], 128, 128, 8
    $region17: #{tpu_custom_call.1} parent=1 // pred_fallthru
      _
    // Predicated region
    $region18: #{tpu_custom_call.1} parent=1 // pred_check
      _
    $region19: #{tpu_custom_call.1} parent=1 // pred_check_branch
      %46 = sbr.rel (0) target = $region21
    $region20: #{tpu_custom_call.1} parent=1 // pred_region
      %48 = vsyncadd [#allocation6], 0
      %s49 = sshll.u32 %s4, 4
      %s50 = int_to_ptr.hbm [resolvable:$true] %s49
      %s51 = sshll.u32 [#allocation7], 4
      %s52 = int_to_ptr.vmem [resolvable:$true] %s51
      %57 = dma.hbm_to_vmem [thread:$0]  %s50, 1024, %s52, [#allocation6], 128, 128, 8
    $region21: #{tpu_custom_call.1} parent=1 // pred_fallthru
      _
    // Predicated region
    $region22: #{tpu_custom_call.1} parent=1 // pred_check
      _
    $region23: #{tpu_custom_call.1} parent=1 // pred_check_branch
      %59 = sbr.rel (0) target = $region25
    $region24: #{tpu_custom_call.1} parent=1 // pred_region
      %61 = vsyncadd [#allocation9], 0
      %s62 = sshll.u32 %s5, 4
      %s63 = int_to_ptr.hbm [resolvable:$true] %s62
      %s64 = sshll.u32 [#allocation8], 4
      %s65 = int_to_ptr.vmem [resolvable:$true] %s64
      %70 = dma.hbm_to_vmem [thread:$0]  %s63, 256, %s65, [#allocation9], 128, 128, 8
    $region25: #{tpu_custom_call.1} parent=1 // pred_fallthru
      _
    // Predicated region
    $region26: #{tpu_custom_call.1} parent=1 // pred_check
      _
    $region27: #{tpu_custom_call.1} parent=1 // pred_check_branch
      %72 = sbr.rel (0) target = $region29
    $region28: #{tpu_custom_call.1} parent=1 // pred_region
      %74 = dma.done [#allocation3], 512
    $region29: #{tpu_custom_call.1} parent=1 // pred_fallthru
      _
    // Predicated region
    $region30: #{tpu_custom_call.1} parent=1 // pred_check
      _
    $region31: #{tpu_custom_call.1} parent=1 // pred_check_branch
      %76 = sbr.rel (0) target = $region33
    $region32: #{tpu_custom_call.1} parent=1 // pred_region
      %78 = dma.done [#allocation6], 256
    $region33: #{tpu_custom_call.1} parent=1 // pred_fallthru
      _
    // Predicated region
    $region34: #{tpu_custom_call.1} parent=1 // pred_check
      _
    $region35: #{tpu_custom_call.1} parent=1 // pred_check_branch
      %80 = sbr.rel (0) target = $region37
    $region36: #{tpu_custom_call.1} parent=1 // pred_region
      %82 = dma.done [#allocation6], 1024
    $region37: #{tpu_custom_call.1} parent=1 // pred_fallthru
      _
    // Predicated region
    $region38: #{tpu_custom_call.1} parent=1 // pred_check
      _
    $region39: #{tpu_custom_call.1} parent=1 // pred_check_branch
      %84 = sbr.rel (0) target = $region41
    $region40: #{tpu_custom_call.1} parent=1 // pred_region
      %86 = dma.done [#allocation9], 256
    $region41: #{tpu_custom_call.1} parent=1 // pred_fallthru
      _
    %v87 = vld [vmem:[%s0] sm:$0xff]
    %v88 = vld [vmem:[%s0 + $0x8] sm:$0xff]
    %v89 = vld [vmem:[%s0 + $0x10] sm:$0xff]
    %v90 = vld [vmem:[%s0 + $0x18] sm:$0xff]
    %v91 = vld [vmem:[%s0 + $0x20] sm:$0xff]
    %v92 = vld [vmem:[%s0 + $0x28] sm:$0xff]
    %v93 = vld [vmem:[%s0 + $0x30] sm:$0xff]
    %v94 = vld [vmem:[%s0 + $0x38] sm:$0xff]
    %v95 = vrot.slane %v87, 7
    %v96 = vrot.slane %v88, 7
    %v97 = vrot.slane %v89, 7
    %v98 = vrot.slane %v90, 7
    %v99 = vrot.slane %v91, 7
    %v100 = vrot.slane %v92, 7
    %v101 = vrot.slane %v93, 7
    %v102 = vrot.slane %v94, 7
    %v103 = vlaneseq
    %v104 = vshrl.u32 %v103, 7
    %vm105 = vcmp.lt.s32.totalorder %v104, 1
    %v106 = vsel %vm105, %v101, %v102
    %v107 = vsel %vm105, %v100, %v101
    %v108 = vsel %vm105, %v99, %v100
    %v109 = vsel %vm105, %v98, %v99
    %v110 = vsel %vm105, %v97, %v98
    %v111 = vsel %vm105, %v96, %v97
    %v112 = vsel %vm105, %v95, %v96
    %v113 = vsel %vm105, %v102, %v95
    %v114 = vld [vmem:[%s1] sm:$0xff]
    %v115 = vld [vmem:[%s1 + $0x8] sm:$0xff]
    %v116 = vld [vmem:[%s1 + $0x10] sm:$0xff]
    %v117 = vld [vmem:[%s1 + $0x18] sm:$0xff]
    %v118 = vld [vmem:[%s1 + $0x20] sm:$0xff]
    %v119 = vld [vmem:[%s1 + $0x28] sm:$0xff]
    %v120 = vld [vmem:[%s1 + $0x30] sm:$0xff]
    %v121 = vld [vmem:[%s1 + $0x38] sm:$0xff]
    %123 = vset.pattern.permute.xlu0 0
    %124 = vperm.xlu0 %123, %v114
    %v125 = vpop.permute.xlu0 %124
    %128 = vset.pattern.permute.xlu0 0
    %129 = vperm.xlu0 %128, %v115
    %v130 = vpop.permute.xlu0 %129
    %133 = vset.pattern.permute.xlu0 0
    %134 = vperm.xlu0 %133, %v116
    %v135 = vpop.permute.xlu0 %134
    %138 = vset.pattern.permute.xlu0 0
    %139 = vperm.xlu0 %138, %v117
    %v140 = vpop.permute.xlu0 %139
    %143 = vset.pattern.permute.xlu0 0
    %144 = vperm.xlu0 %143, %v118
    %v145 = vpop.permute.xlu0 %144
    %148 = vset.pattern.permute.xlu0 0
    %149 = vperm.xlu0 %148, %v119
    %v150 = vpop.permute.xlu0 %149
    %153 = vset.pattern.permute.xlu0 0
    %154 = vperm.xlu0 %153, %v120
    %v155 = vpop.permute.xlu0 %154
    %158 = vset.pattern.permute.xlu0 0
    %159 = vperm.xlu0 %158, %v121
    %v160 = vpop.permute.xlu0 %159
    %v162 = vmul.f32 %v125, %v113
    %v163 = vmul.f32 %v130, %v112
    %v164 = vmul.f32 %v135, %v111
    %v165 = vmul.f32 %v140, %v110
    %v166 = vmul.f32 %v145, %v109
    %v167 = vmul.f32 %v150, %v108
    %v168 = vmul.f32 %v155, %v107
    %v169 = vmul.f32 %v160, %v106
    %v170 = vsub.f32 %v87, %v162
    %v171 = vsub.f32 %v88, %v163
    %v172 = vsub.f32 %v89, %v164
    %v173 = vsub.f32 %v90, %v165
    %v174 = vsub.f32 %v91, %v166
    %v175 = vsub.f32 %v92, %v167
    %v176 = vsub.f32 %v93, %v168
    %v177 = vsub.f32 %v94, %v169
    %v178 = vld [vmem:[#allocation2] sm:$0xff]
    %v179 = vld [vmem:[#allocation2 + $0x8] sm:$0xff]
    %v180 = vld [vmem:[#allocation2 + $0x10] sm:$0xff]
    %v181 = vld [vmem:[#allocation2 + $0x18] sm:$0xff]
    %vm182 = vcmask 261120
    %v184 = vsel %vm182, %v170, 0
    %v187 = vsel %vm182, %v171, 0
    %v190 = vsel %vm182, %v172, 0
    %v193 = vsel %vm182, %v173, 0
    %v196 = vsel %vm182, %v174, 0
    %v199 = vsel %vm182, %v175, 0
    %v202 = vsel %vm182, %v176, 0
    %v205 = vsel %vm182, %v177, 0
    %207 = vmatpush.msra.mxu0 0.0
    %208 = vmatpush.msra.mxu0 0.0
    %209 = vmatpush.msra.mxu0 0.0
    %210 = vmatpush.msra.mxu0 0.0
    %211 = vmatpush.msra.mxu0 0.0
    %212 = vmatpush.msra.mxu0 0.0
    %213 = vmatpush.msra.mxu0 0.0
    %214 = vmatpush.msra.mxu0 0.0
    %215 = vmatpush.msra.mxu0 0.0
    %216 = vmatpush.msra.mxu0 0.0
    %217 = vmatpush.msra.mxu0 0.0
    %218 = vmatpush.msra.mxu0 0.0
    %219 = vmatpush.msra.mxu0 %v181
    %220 = vmatpush.msra.mxu0 %v180
    %221 = vmatpush.msra.mxu0 %v179
    %222 = vmatpush.msra.mxu0 %v178
    %223 = vmatmul.f32.gmra.mxu0 %v184
    %v224 = vpop.f32.mrf.mxu0
    %v225 = vadd.f32 0.0, %v224
    %226 = vmatmul.f32.gmra.mxu0 %v187
    %v227 = vpop.f32.mrf.mxu0
    %v228 = vadd.f32 0.0, %v227
    %229 = vmatmul.f32.gmra.mxu0 %v190
    %v230 = vpop.f32.mrf.mxu0
    %v231 = vadd.f32 0.0, %v230
    %232 = vmatmul.f32.gmra.mxu0 %v193
    %v233 = vpop.f32.mrf.mxu0
    %v234 = vadd.f32 0.0, %v233
    %235 = vmatmul.f32.gmra.mxu0 %v196
    %v236 = vpop.f32.mrf.mxu0
    %v237 = vadd.f32 0.0, %v236
    %238 = vmatmul.f32.gmra.mxu0 %v199
    %v239 = vpop.f32.mrf.mxu0
    %v240 = vadd.f32 0.0, %v239
    %241 = vmatmul.f32.gmra.mxu0 %v202
    %v242 = vpop.f32.mrf.mxu0
    %v243 = vadd.f32 0.0, %v242
    %244 = vmatmul.f32.gmra.mxu0 %v205
    %v245 = vpop.f32.mrf.mxu0
    %v246 = vadd.f32 0.0, %v245
    %247 = vdwg.mxu0
    %v248 = vmax.f32 %v225, 0.0
    %v249 = vmax.f32 %v228, 0.0
    %v250 = vmax.f32 %v231, 0.0
    %v251 = vmax.f32 %v234, 0.0
    %v252 = vmax.f32 %v237, 0.0
    %v253 = vmax.f32 %v240, 0.0
    %v254 = vmax.f32 %v243, 0.0
    %v255 = vmax.f32 %v246, 0.0
    %v256 = vld [vmem:[#allocation5] sm:$0xff]
    %v257 = vld [vmem:[#allocation5 + $0x8] sm:$0xff]
    %v259 = vsel %vm182, %v256, 0
    %v262 = vsel %vm182, %v257, 0
    %264 = vmatpush.msra.mxu0 0.0
    %265 = vmatpush.msra.mxu0 0.0
    %266 = vmatpush.msra.mxu0 0.0
    %267 = vmatpush.msra.mxu0 0.0
    %268 = vmatpush.msra.mxu0 0.0
    %269 = vmatpush.msra.mxu0 0.0
    %270 = vmatpush.msra.mxu0 0.0
    %271 = vmatpush.msra.mxu0 0.0
    %272 = vmatpush.msra.mxu0 0.0
    %273 = vmatpush.msra.mxu0 0.0
    %274 = vmatpush.msra.mxu0 0.0
    %275 = vmatpush.msra.mxu0 0.0
    %276 = vmatpush.msra.mxu0 %v251
    %277 = vmatpush.msra.mxu0 %v250
    %278 = vmatpush.msra.mxu0 %v249
    %279 = vmatpush.msra.mxu0 %v248
    %280 = vmatmul.f32.gmra.mxu0 %v259
    %v281 = vpop.f32.mrf.mxu0
    %v282 = vadd.f32 0.0, %v281
    %283 = vmatmul.f32.gmra.mxu0 %v262
    %v284 = vpop.f32.mrf.mxu0
    %v285 = vadd.f32 0.0, %v284
    %286 = vdwg.mxu0
    %287 = vmatpush.msra.mxu0 0.0
    %288 = vmatpush.msra.mxu0 0.0
    %289 = vmatpush.msra.mxu0 0.0
    %290 = vmatpush.msra.mxu0 0.0
    %291 = vmatpush.msra.mxu0 0.0
    %292 = vmatpush.msra.mxu0 0.0
    %293 = vmatpush.msra.mxu0 0.0
    %294 = vmatpush.msra.mxu0 0.0
    %295 = vmatpush.msra.mxu0 0.0
    %296 = vmatpush.msra.mxu0 0.0
    %297 = vmatpush.msra.mxu0 0.0
    %298 = vmatpush.msra.mxu0 0.0
    %299 = vmatpush.msra.mxu0 %v255
    %300 = vmatpush.msra.mxu0 %v254
    %301 = vmatpush.msra.mxu0 %v253
    %302 = vmatpush.msra.mxu0 %v252
    %303 = vmatmul.f32.gmra.mxu0 %v259
    %v304 = vpop.f32.mrf.mxu0
    %v305 = vadd.f32 0.0, %v304
    %306 = vmatmul.f32.gmra.mxu0 %v262
    %v307 = vpop.f32.mrf.mxu0
    %v308 = vadd.f32 0.0, %v307
    %309 = vdwg.mxu0
    %v310 = vld [vmem:[#allocation7] sm:$0xff]
    %v311 = vld [vmem:[#allocation7 + $0x8] sm:$0xff]
    %v312 = vld [vmem:[#allocation7 + $0x10] sm:$0xff]
    %v313 = vld [vmem:[#allocation7 + $0x18] sm:$0xff]
    %v314 = vld [vmem:[#allocation7 + $0x20] sm:$0xff]
    %v315 = vld [vmem:[#allocation7 + $0x28] sm:$0xff]
    %v316 = vld [vmem:[#allocation7 + $0x30] sm:$0xff]
    %v317 = vld [vmem:[#allocation7 + $0x38] sm:$0xff]
    %vm318 = vcmask 523264
    %v320 = vsel %vm318, %v282, 0
    %v323 = vsel %vm318, %v285, 0
    %v326 = vsel %vm318, %v305, 0
    %v329 = vsel %vm318, %v308, 0
    %331 = vmatpush.msra.mxu0 0.0
    %332 = vmatpush.msra.mxu0 0.0
    %333 = vmatpush.msra.mxu0 0.0
    %334 = vmatpush.msra.mxu0 0.0
    %335 = vmatpush.msra.mxu0 0.0
    %336 = vmatpush.msra.mxu0 0.0
    %337 = vmatpush.msra.mxu0 0.0
    %338 = vmatpush.msra.mxu0 0.0
    %339 = vmatpush.msra.mxu0 %v317
    %340 = vmatpush.msra.mxu0 %v316
    %341 = vmatpush.msra.mxu0 %v315
    %342 = vmatpush.msra.mxu0 %v314
    %343 = vmatpush.msra.mxu0 %v313
    %344 = vmatpush.msra.mxu0 %v312
    %345 = vmatpush.msra.mxu0 %v311
    %346 = vmatpush.msra.mxu0 %v310
    %347 = vmatmul.f32.gmra.mxu0 %v320
    %v348 = vpop.f32.mrf.mxu0
    %v349 = vadd.f32 0.0, %v348
    %350 = vmatmul.f32.gmra.mxu0 %v323
    %v351 = vpop.f32.mrf.mxu0
    %v352 = vadd.f32 0.0, %v351
    %353 = vmatmul.f32.gmra.mxu0 %v326
    %v354 = vpop.f32.mrf.mxu0
    %v355 = vadd.f32 0.0, %v354
    %356 = vmatmul.f32.gmra.mxu0 %v329
    %v357 = vpop.f32.mrf.mxu0
    %v358 = vadd.f32 0.0, %v357
    %359 = vdwg.mxu0
    %v360 = vld [vmem:[#allocation8] sm:$0xff]
    %v361 = vld [vmem:[#allocation8 + $0x8] sm:$0xff]
    %v362 = vadd.f32 %v349, %v360
    %v363 = vadd.f32 %v352, %v361
    %v364 = vadd.f32 %v355, %v360
    %v365 = vadd.f32 %v358, %v361
    %366 = vst [vmem:[#allocation10] sm:$0xff] %v362
    %367 = vst [vmem:[#allocation10 + $0x8] sm:$0xff] %v363
    %368 = vst [vmem:[#allocation10 + $0x10] sm:$0xff] %v364
    %369 = vst [vmem:[#allocation10 + $0x18] sm:$0xff] %v365
    // Predicated region
    $region42: #{tpu_custom_call.1} parent=1 // pred_check
      _
    $region43: #{tpu_custom_call.1} parent=1 // pred_check_branch
      %371 = sbr.rel (0) target = $region45
    $region44: #{tpu_custom_call.1} parent=1 // pred_region
      %373 = vsyncadd [#allocation4], 0
      %s374 = sshll.u32 [#allocation10], 4
      %s375 = int_to_ptr.vmem [resolvable:$true] %s374
      %s376 = sshll.u32 %s6, 4
      %s377 = int_to_ptr.hbm [resolvable:$true] %s376
      %382 = dma.vmem_to_hbm [thread:$0]  %s375, 512, %s377, [#allocation4], 128, 128, 8
    $region45: #{tpu_custom_call.1} parent=1 // pred_fallthru
      _
    // Predicated region
    $region46: #{tpu_custom_call.1} parent=1 // pred_check
      _
    $region47: #{tpu_custom_call.1} parent=1 // pred_check_branch
      %384 = sbr.rel (0) target = $region49
    $region48: #{tpu_custom_call.1} parent=1 // pred_region
      %386 = dma.done [#allocation4], 512
    $region49: #{tpu_custom_call.1} parent=1 // pred_fallthru
      _
    %387 = vsyncpa [#allocation3], 1
    %388 = vsyncpa [#allocation6], 1
    %389 = vsyncpa [#allocation9], 1
    %390 = vsyncpa [#allocation4], 1

</llo_original>
